<compile_context>
chip_gen: v7x
topology: tpu7x:2x2x1
jax: 0.10.0
libtpu: 0.0.40
codegen_flags: <defaults>
</compile_context>

<pallas_src>
import jax
import jax.numpy as jnp
from jax import lax
from jax.experimental import pallas as pl
from jax.experimental.pallas import tpu as pltpu


_LANE = 128              # TPU lane width: output last dim padded to this
_SUBLANE = 8
_PALLAS_MIN_BATCH = 64   # below this, dispatch overhead dominates -> plain JAX


def _round_up(x, m):
    return ((x + m - 1) // m) * m


# ---------------------------------------------------------------------------
# Pallas kernel: one fused affine map  raw = x_flat @ A + c
# ---------------------------------------------------------------------------
def _affine_decoder_kernel(x_ref, a_ref, c_ref, raw_ref):
    """
    x_ref  : [TB, K]      flattened latent block (K = Cin*5*5 = 400)
    a_ref  : [K,  M_pad]  precomposed conv1∘conv2∘dense weight (lane-padded)
    c_ref  : [1,  M_pad]  precomposed bias (lane-padded, f32)
    raw_ref: [TB, M_pad]  pre-sigmoid dense output (lane-dense: M_pad % 128 == 0)
    """
    raw_ref[...] = (
        jnp.dot(x_ref[...], a_ref[...], preferred_element_type=jnp.float32)
        + c_ref[...]
    )


# ---------------------------------------------------------------------------
# One-time parameter preparation (runs once, outside the per-call path).
# Composes conv1 -> conv2 -> dense_bbx into a single affine map (A, c),
# zero-padded to a lane-dense output width.
# ---------------------------------------------------------------------------
def prepare_decoder_params(params, num_nodes, bbx_size, latent_hw=5,
                           compute_dtype=jnp.float32):
    w1, b1 = params["w1"], params["b1"]        # [H1, Cin, 3, 3], [H1]
    w2, b2 = params["w2"], params["b2"]        # [N,  H1,  3, 3], [N]
    wd, bd = params["wd"], params["bd"]        # [N*bbx, N],      [N*bbx]
    cin = w1.shape[1]
    k = cin * latent_hw * latent_hw
    m = num_nodes * bbx_size
    m_pad = _round_up(m, _LANE)

    def conv_chain(x, with_bias):
        y = lax.conv_general_dilated(x, w1, (1, 1), "VALID",
                                     dimension_numbers=("NCHW", "OIHW", "NCHW"))
        if with_bias:
            y = y + b1[None, :, None, None]
        y = lax.conv_general_dilated(y, w2, (1, 1), "VALID",
                                     dimension_numbers=("NCHW", "OIHW", "NCHW"))
        if with_bias:
            y = y + b2[None, :, None, None]
        return y[:, :, 0, 0]                   # 5x5 latent -> 1x1, squeezed

    # Linear part: push the identity basis of flattened latents through the
    # (bias-free) conv stack, then through the dense weight.
    basis = jnp.eye(k, dtype=jnp.float32).reshape(k, cin, latent_hw, latent_hw)
    A = conv_chain(basis, with_bias=False) @ wd.T                      # [k, m]
    # Bias part: the affine map evaluated at zero input.
    zero = jnp.zeros((1, cin, latent_hw, latent_hw), jnp.float32)
    c = conv_chain(zero, with_bias=True) @ wd.T + bd[None, :]          # [1, m]

    # Lane-dense padding (perf-review item: avoid masked stores / MXU N pad).
    A_pad = jnp.zeros((k, m_pad), jnp.float32).at[:, :m].set(A)
    c_pad = jnp.zeros((1, m_pad), jnp.float32).at[:, :m].set(c)
    return {"A": A_pad.astype(compute_dtype), "c": c_pad}


# ---------------------------------------------------------------------------
# Batch-tile selection (perf-review items 1 & 6)
# ---------------------------------------------------------------------------
def _pick_batch_tile(B):
    # Large tiles amortize the ~0.35us/grid-step overhead; the B//2 term keeps
    # >= 2 grid blocks once B >= 1024 (v7x dual-TC sharding); the 2048 cap
    # bounds double-buffered VMEM (~9 MB worst case) on every generation.
    return min(B, max(_round_up(B // 2, _SUBLANE), 512), 2048)


# ---------------------------------------------------------------------------
# Per-call wrapper: reshape -> (plain JAX | single pallas matmul) -> reshape
# ---------------------------------------------------------------------------
def cnn_decoder_forward(latent_X, nodes, prepared, num_nodes, bbx_size,
                        *, force_pallas=False):
    """latent_X: [B, hidden2, 5, 5] (NCHW, like PyTorch).  `nodes` is unused
    by the reference forward.  Returns the PRE-sigmoid dense output reshaped
    to [B, num_nodes, bbx_size] (the sigmoid in the reference is dead code)."""
    del nodes  # unused in the reference forward
    A, c = prepared["A"], prepared["c"]
    K, M_pad = A.shape
    M = num_nodes * bbx_size
    B = latent_X.shape[0]

    # NCHW flattening matches the (Cin, H, W) ordering used to build A.
    x_flat = latent_X.reshape(B, K).astype(A.dtype)

    if B < _PALLAS_MIN_BATCH and not force_pallas:
        # Tiny batch (~50 KFLOP at B=2): custom-call dispatch + DMA prologue
        # dominate and the call boundary blocks XLA fusion -> stay in XLA.
        raw = jnp.dot(x_flat, A, preferred_element_type=jnp.float32) + c
    else:
        TB = _pick_batch_tile(B)
        grid = (pl.cdiv(B, TB),)
        # NOTE: if B % TB != 0, the padded rows of the last block compute
        # garbage that Pallas discards on writeback (harmless; do not expose
        # the padded region via input_output_aliases).
        cost = pl.CostEstimate(
            flops=2 * B * K * M_pad,
            transcendentals=0,
            bytes_accessed=(B * K * x_flat.dtype.itemsize
                            + K * M_pad * A.dtype.itemsize
                            + M_pad * 4
                            + B * M_pad * 4),
        )
        raw = pl.pallas_call(
            _affine_decoder_kernel,
            out_shape=jax.ShapeDtypeStruct((B, M_pad), jnp.float32),
            grid=grid,
            in_specs=[
                pl.BlockSpec((TB, K), lambda i: (i, 0)),
                # A and c are grid-invariant (index_map -> (0, 0) for all i);
                # pl.Buffered(1) would drop their 2nd buffer but saves <200 KB
                # here, so it is intentionally omitted (see header notes).
                pl.BlockSpec((K, M_pad), lambda i: (0, 0)),
                pl.BlockSpec((1, M_pad), lambda i: (0, 0)),
            ],
            out_specs=pl.BlockSpec((TB, M_pad), lambda i: (i, 0)),
            compiler_params=pltpu.CompilerParams(
                dimension_semantics=("parallel",)),  # v7x: shard batch blocks
            cost_estimate=cost,
        )(x_flat, A, c)

    # Reference returns the PRE-sigmoid x_bbx reshaped; the sigmoid (X_bbx)
    # is dead code in the reference and is intentionally not computed.
    return raw[:, :M].reshape(B, num_nodes, bbx_size)


# ---------------------------------------------------------------------------
# Pure-JAX reference (for correctness check) and deterministic params
# ---------------------------------------------------------------------------
def reference_forward(latent_X, params, num_nodes, bbx_size):
    y = lax.conv_general_dilated(latent_X, params["w1"], (1, 1), "VALID",
                                 dimension_numbers=("NCHW", "OIHW", "NCHW"))
    y = y + params["b1"][None, :, None, None]
    y = lax.conv_general_dilated(y, params["w2"], (1, 1), "VALID",
                                 dimension_numbers=("NCHW", "OIHW", "NCHW"))
    y = y + params["b2"][None, :, None, None]
    feat = y[:, :, 0, 0]                                   # [B, num_nodes]
    raw = feat @ params["wd"].T + params["bd"]             # [B, num_nodes*bbx]
    return raw.reshape(latent_X.shape[0], num_nodes, bbx_size)


def init_params(key, hidden1, hidden2, num_nodes, bbx_size):
    k1, k2, k3, k4, k5, k6 = jax.random.split(key, 6)

    def u(k, shape, fan_in):
        b = 1.0 / jnp.sqrt(fan_in)
        return jax.random.uniform(k, shape, jnp.float32, -b, b)

    return {
        "w1": u(k1, (hidden1, hidden2, 3, 3), hidden2 * 9),
        "b1": u(k2, (hidden1,), hidden2 * 9),
        "w2": u(k3, (num_nodes, hidden1, 3, 3), hidden1 * 9),
        "b2": u(k4, (num_nodes,), hidden1 * 9),
        "wd": u(k5, (num_nodes * bbx_size, num_nodes), num_nodes),
        "bd": u(k6, (num_nodes * bbx_size,), num_nodes),
    }


if __name__ == "__main__":
    # Config consistent with the module's __init__ defaults (hidden1=32,
    # hidden2=16); latent spatial = 5x5 so two valid 3x3 convs reduce to 1x1
    # (required by the reference reshape).
    B, hidden1, hidden2 = 2, 32, 16
    num_nodes, bbx_size = 8, 4

    key = jax.random.PRNGKey(0)
    kp, kx, kx2 = jax.random.split(key, 3)
    params = init_params(kp, hidden1, hidden2, num_nodes, bbx_size)

    # One-time parameter preparation (kept out of the per-call path).
    prep_f32 = jax.block_until_ready(
        prepare_decoder_params(params, num_nodes, bbx_size, latent_hw=5))

    # --- 1) module-sized input (B=2): force the Pallas path and verify ----
    latent_small = jax.random.normal(kx, (B, hidden2, 5, 5), jnp.float32)
    nodes_small = jnp.zeros((B, num_nodes), jnp.float32)   # unused by forward
    ref_small = reference_forward(latent_small, params, num_nodes, bbx_size)

    out_small = jax.block_until_ready(cnn_decoder_forward(
        latent_small, nodes_small, prep_f32, num_nodes, bbx_size,
        force_pallas=True))
    assert out_small.shape == (B, num_nodes, bbx_size), out_small.shape
    assert jnp.allclose(out_small, ref_small, rtol=1e-3, atol=1e-3), \
        float(jnp.max(jnp.abs(out_small - ref_small)))

    # Default dispatch at B=2 takes the plain-JAX fallback (same numbers).
    out_small2 = jax.block_until_ready(cnn_decoder_forward(
        latent_small, nodes_small, prep_f32, num_nodes, bbx_size))
    assert jnp.allclose(out_small2, ref_small, rtol=1e-3, atol=1e-3), \
        float(jnp.max(jnp.abs(out_small2 - ref_small)))

    # --- 2) larger batch: exercises the tiled Pallas path (f32) -----------
    B2 = 256
    latent_big = jax.random.normal(kx2, (B2, hidden2, 5, 5), jnp.float32)
    nodes_big = jnp.zeros((B2, num_nodes), jnp.float32)
    ref_big = reference_forward(latent_big, params, num_nodes, bbx_size)

    out_big = jax.block_until_ready(cnn_decoder_forward(
        latent_big, nodes_big, prep_f32, num_nodes, bbx_size))
    assert out_big.shape == (B2, num_nodes, bbx_size), out_big.shape
    assert jnp.allclose(out_big, ref_big, rtol=1e-3, atol=1e-3), \
        float(jnp.max(jnp.abs(out_big - ref_big)))

    # --- 3) bf16 weights/activations (throughput path, looser tolerance) --
    prep_bf16 = jax.block_until_ready(
        prepare_decoder_params(params, num_nodes, bbx_size, latent_hw=5,
                               compute_dtype=jnp.bfloat16))
    out_bf16 = jax.block_until_ready(cnn_decoder_forward(
        latent_big, nodes_big, prep_bf16, num_nodes, bbx_size))
    assert jnp.allclose(out_bf16, ref_big, rtol=5e-2, atol=5e-2), \
        float(jnp.max(jnp.abs(out_bf16 - ref_big)))

    print("KERNEL_OK")
</pallas_src>

<mosaic_0001>
module attributes {stable_mosaic.version = 11 : i64} {
  func.func @_affine_decoder_kernel(%arg0: i32, %arg1: memref<2x400xf32, #tpu.memory_space<vmem>>, %arg2: memref<400x128xf32, #tpu.memory_space<vmem>>, %arg3: memref<1x128xf32, #tpu.memory_space<vmem>>, %arg4: memref<2x128xf32, #tpu.memory_space<vmem>>) attributes {dimension_semantics = [#tpu.dimension_semantics<parallel>], iteration_bounds = array<i64: 1>, scalar_prefetch = 0 : i64, scratch_operands = 0 : i64, tpu.core_type = #tpu.core_type<tc>, window_params = [{transform_indices = @transform_0, window_bounds = array<i64: 2, 400>}, {pipeline_mode = #tpu.pipeline_mode<synchronous>, transform_indices = @transform_1, window_bounds = array<i64: 400, 128>}, {pipeline_mode = #tpu.pipeline_mode<synchronous>, transform_indices = @transform_2, window_bounds = array<i64: 1, 128>}, {transform_indices = @transform_3, window_bounds = array<i64: 2, 128>}]} {
    %c0 = arith.constant 0 : index
    %c0_0 = arith.constant 0 : index
    %0 = vector.load %arg1[%c0, %c0_0] : memref<2x400xf32, #tpu.memory_space<vmem>>, vector<2x400xf32>
    %c0_1 = arith.constant 0 : index
    %c0_2 = arith.constant 0 : index
    %1 = vector.load %arg2[%c0_1, %c0_2] : memref<400x128xf32, #tpu.memory_space<vmem>>, vector<400x128xf32>
    %cst = arith.constant dense<0.000000e+00> : vector<2x128xf32>
    %2 = tpu.matmul %0, %1, %cst {dimension_numbers = #tpu.dot_dimension_numbers<[1], [0], [0], [1], [0, 0, 1, 1], [], []>} : vector<2x400xf32>, vector<400x128xf32>, vector<2x128xf32> -> vector<2x128xf32>
    %c0_3 = arith.constant 0 : index
    %c0_4 = arith.constant 0 : index
    %3 = vector.load %arg3[%c0_3, %c0_4] : memref<1x128xf32, #tpu.memory_space<vmem>>, vector<1x128xf32>
    %4 = vector.broadcast %3 : vector<1x128xf32> to vector<2x128xf32>
    %5 = arith.addf %2, %4 : vector<2x128xf32>
    %c0_5 = arith.constant 0 : index
    %c0_6 = arith.constant 0 : index
    %6 = vector.load %arg4[%c0_5, %c0_6] : memref<2x128xf32, #tpu.memory_space<vmem>>, vector<2x128xf32>
    tpu.vector_store %arg4[%c0_5, %c0_6], %5 {strides = array<i32>} : memref<2x128xf32, #tpu.memory_space<vmem>>, vector<2x128xf32>,
    return
  }
  func.func @transform_0(%arg0: i32) -> (i32, i32) {
    %c0_i32 = arith.constant 0 : i32
    %c0_i32_0 = arith.constant 0 : i32
    return %arg0, %c0_i32 : i32, i32
  }
  func.func @transform_1(%arg0: i32) -> (i32, i32) {
    %c0_i32 = arith.constant 0 : i32
    %c0_i32_0 = arith.constant 0 : i32
    %c0_i32_1 = arith.constant 0 : i32
    return %c0_i32, %c0_i32_0 : i32, i32
  }
  func.func @transform_2(%arg0: i32) -> (i32, i32) {
    %c0_i32 = arith.constant 0 : i32
    %c0_i32_0 = arith.constant 0 : i32
    %c0_i32_1 = arith.constant 0 : i32
    return %c0_i32, %c0_i32_0 : i32, i32
  }
  func.func @transform_3(%arg0: i32) -> (i32, i32) {
    %c0_i32 = arith.constant 0 : i32
    %c0_i32_0 = arith.constant 0 : i32
    return %arg0, %c0_i32 : i32, i32
  }
}

</mosaic_0001>

<llo_original>
// kernel: tpu_custom_call.1
$region0: #{tpu_custom_call.1}
  #allocation0 [shape = 'u32[]', space=smem, size = 0x4, offset = 0x4, fixed_abs, tag = 'smem constant byte address 0x4 - core index']
  #allocation1 [shape = 'u32[144,128]{1,0:T(1,128)}', space=vmem, size = 0x12000, scoped, tag = 'internal scratch']
  %s0 = inlined_call_operand.hbm [shape: f32[2,400], index: 0, kind: input, shape index: {}]
  %s1 = inlined_call_operand.hbm [shape: f32[400,128], index: 1, kind: input, shape index: {}]
  %s2 = inlined_call_operand.vmem [shape: f32[1,128], index: 2, kind: input, shape index: {}]
  %s3 = inlined_call_operand.hbm [shape: f32[2,128], index: 3, kind: output, shape index: {}]
  %s4 = sld [smem:[#allocation0]]
  $region30: #{tpu_custom_call.1} parent=0
    _
  %s6 = ssub.s32 1, %s4
  %s7 = scalar_select 0, %s6, %s4
  $region1: #{tpu_custom_call.1} parent=0
    #allocation2 [shape = 'u8[4096]{0}', space=vmem, size = 0x1000, scoped, tag = 'input window, operand 0, single buffered']
    #allocation3 [shape = 's32[1]{0}', space=sflag, size = 0x4, scoped, tag = 'scoped memory for tpu_custom_call.1']
    #allocation4 [shape = 's32[1]{0}', space=sflag, size = 0x4, scoped, tag = 'scoped memory for tpu_custom_call.1']
    #allocation5 [shape = 'u8[204800]{0}', space=vmem, size = 0x32000, scoped, tag = 'input window, operand 1, single buffered']
    #allocation6 [shape = 's32[1]{0}', space=sflag, size = 0x4, scoped, tag = 'scoped memory for tpu_custom_call.1']
    #allocation7 [shape = 'u8[1024]{0}', space=vmem, size = 0x400, scoped, tag = 'output window, operand 0, single buffered']
    %8 = vsyncpa [#allocation3], 0
    %9 = vsyncpa [#allocation6], 0
    %10 = vsyncpa [#allocation4], 0
    // Predicated region
    $region2: #{tpu_custom_call.1} parent=1 // pred_check
      _
    $region3: #{tpu_custom_call.1} parent=1 // pred_check_branch
      %12 = sbr.rel (0) target = $region5
    $region4: #{tpu_custom_call.1} parent=1 // pred_region
      %s14 = ssub.s32 128, 128
      %15 = vsyncadd [#allocation3], %s14
      %s17 = sshll.u32 [#allocation2], 4
      %s18 = int_to_ptr.vmem [resolvable:$true] %s17
      %20 = dma.hbm_to_vmem [thread:$0]  %s0, 128, %s18, [#allocation3]
    $region5: #{tpu_custom_call.1} parent=1 // pred_fallthru
      _
    // Predicated region
    $region6: #{tpu_custom_call.1} parent=1 // pred_check
      _
    $region7: #{tpu_custom_call.1} parent=1 // pred_check_branch
      %22 = sbr.rel (0) target = $region9
    $region8: #{tpu_custom_call.1} parent=1 // pred_region
      %s24 = ssub.s32 6400, 6400
      %25 = vsyncadd [#allocation6], %s24
      %s26 = sshll.u32 [#allocation5], 4
      %s27 = int_to_ptr.vmem [resolvable:$true] %s26
      %32 = dma.hbm_to_vmem [thread:$0]  %s1, 6400, %s27, [#allocation6], 128, 128, 8
    $region9: #{tpu_custom_call.1} parent=1 // pred_fallthru
      _
    // Predicated region
    $region10: #{tpu_custom_call.1} parent=1 // pred_check
      _
    $region11: #{tpu_custom_call.1} parent=1 // pred_check_branch
      %34 = sbr.rel (0) target = $region13
    $region12: #{tpu_custom_call.1} parent=1 // pred_region
      _
    $region13: #{tpu_custom_call.1} parent=1 // pred_fallthru
      _
    // Predicated region
    $region14: #{tpu_custom_call.1} parent=1 // pred_check
      _
    $region15: #{tpu_custom_call.1} parent=1 // pred_check_branch
      %36 = sbr.rel (0) target = $region17
    $region16: #{tpu_custom_call.1} parent=1 // pred_region
      %37 = dma.done [#allocation3], 128
    $region17: #{tpu_custom_call.1} parent=1 // pred_fallthru
      _
    // Predicated region
    $region18: #{tpu_custom_call.1} parent=1 // pred_check
      _
    $region19: #{tpu_custom_call.1} parent=1 // pred_check_branch
      %39 = sbr.rel (0) target = $region21
    $region20: #{tpu_custom_call.1} parent=1 // pred_region
      %40 = dma.done [#allocation6], 6400
    $region21: #{tpu_custom_call.1} parent=1 // pred_fallthru
      _
    %v41 = vld [vmem:[#allocation2] sm:$0xff]
    %v42 = vld [vmem:[#allocation5] sm:$0xff]
    %v43 = vld [vmem:[#allocation5 + $0x8] sm:$0xff]
    %v44 = vld [vmem:[#allocation5 + $0x10] sm:$0xff]
    %v45 = vld [vmem:[#allocation5 + $0x18] sm:$0xff]
    %v46 = vld [vmem:[#allocation5 + $0x20] sm:$0xff]
    %v47 = vld [vmem:[#allocation5 + $0x28] sm:$0xff]
    %v48 = vld [vmem:[#allocation5 + $0x30] sm:$0xff]
    %v49 = vld [vmem:[#allocation5 + $0x38] sm:$0xff]
    %v50 = vld [vmem:[#allocation5 + $0x40] sm:$0xff]
    %v51 = vld [vmem:[#allocation5 + $0x48] sm:$0xff]
    %v52 = vld [vmem:[#allocation5 + $0x50] sm:$0xff]
    %v53 = vld [vmem:[#allocation5 + $0x58] sm:$0xff]
    %v54 = vld [vmem:[#allocation5 + $0x60] sm:$0xff]
    %v55 = vld [vmem:[#allocation5 + $0x68] sm:$0xff]
    %v56 = vld [vmem:[#allocation5 + $0x70] sm:$0xff]
    %v57 = vld [vmem:[#allocation5 + $0x78] sm:$0xff]
    %v58 = vld [vmem:[#allocation5 + $0x80] sm:$0xff]
    %v59 = vld [vmem:[#allocation5 + $0x88] sm:$0xff]
    %v60 = vld [vmem:[#allocation5 + $0x90] sm:$0xff]
    %v61 = vld [vmem:[#allocation5 + $0x98] sm:$0xff]
    %v62 = vld [vmem:[#allocation5 + $0xa0] sm:$0xff]
    %v63 = vld [vmem:[#allocation5 + $0xa8] sm:$0xff]
    %v64 = vld [vmem:[#allocation5 + $0xb0] sm:$0xff]
    %v65 = vld [vmem:[#allocation5 + $0xb8] sm:$0xff]
    %v66 = vld [vmem:[#allocation5 + $0xc0] sm:$0xff]
    %v67 = vld [vmem:[#allocation5 + $0xc8] sm:$0xff]
    %v68 = vld [vmem:[#allocation5 + $0xd0] sm:$0xff]
    %v69 = vld [vmem:[#allocation5 + $0xd8] sm:$0xff]
    %v70 = vld [vmem:[#allocation5 + $0xe0] sm:$0xff]
    %v71 = vld [vmem:[#allocation5 + $0xe8] sm:$0xff]
    %v72 = vld [vmem:[#allocation5 + $0xf0] sm:$0xff]
    %v73 = vld [vmem:[#allocation5 + $0xf8] sm:$0xff]
    %v74 = vld [vmem:[#allocation5 + $0x100] sm:$0xff]
    %v75 = vld [vmem:[#allocation5 + $0x108] sm:$0xff]
    %v76 = vld [vmem:[#allocation5 + $0x110] sm:$0xff]
    %v77 = vld [vmem:[#allocation5 + $0x118] sm:$0xff]
    %v78 = vld [vmem:[#allocation5 + $0x120] sm:$0xff]
    %v79 = vld [vmem:[#allocation5 + $0x128] sm:$0xff]
    %v80 = vld [vmem:[#allocation5 + $0x130] sm:$0xff]
    %v81 = vld [vmem:[#allocation5 + $0x138] sm:$0xff]
    %v82 = vld [vmem:[#allocation5 + $0x140] sm:$0xff]
    %v83 = vld [vmem:[#allocation5 + $0x148] sm:$0xff]
    %v84 = vld [vmem:[#allocation5 + $0x150] sm:$0xff]
    %v85 = vld [vmem:[#allocation5 + $0x158] sm:$0xff]
    %v86 = vld [vmem:[#allocation5 + $0x160] sm:$0xff]
    %v87 = vld [vmem:[#allocation5 + $0x168] sm:$0xff]
    %v88 = vld [vmem:[#allocation5 + $0x170] sm:$0xff]
    %v89 = vld [vmem:[#allocation5 + $0x178] sm:$0xff]
    %v90 = vld [vmem:[#allocation5 + $0x180] sm:$0xff]
    %v91 = vld [vmem:[#allocation5 + $0x188] sm:$0xff]
    %v92 = vld [vmem:[%s2] sm:$0x1]
    %v94 = vlaneseq
    %v95 = vshrl.u32 %v94, 7
    %v96 = vsub.s32 0, %v95
    %v97 = vrot.slane %v92, %v96
    %v100 = vcombine.high %v41, %v41
    %v102 = vunpack.c.l.s4 1983009808
    %v103 = vunpack.c.0.s8 %v102
    %v104 = vlaneseq
    %v105 = vshrl.u32 %v104, 7
    %v106 = vsub.s32 %v103, %v105
    %v107 = vrot.slane %v41, %v106
    %v109 = vunpack.c.l.s4 1983009808
    %v110 = vunpack.c.0.s8 %v109
    %v111 = vlaneseq
    %v112 = vshrl.u32 %v111, 7
    %v113 = vsub.s32 %v110, %v112
    %v114 = vrot.slane %v100, %v113
    %v115 = vcombine.high %v107, %v107
    %v116 = vcombine.high %v114, %v114
    %vm120 = vcmask 130048
    %v121 = vsel %vm120, %v116, 0
    %123 = vmatprep.subr.mxu0 0.0
    %124 = vmatpush1.msra.mxu0 %v42
    %125 = vmatprep.subr.mxu0 0.0
    %126 = vmatpush1.msra.mxu0 %v43
    %127 = vmatprep.subr.mxu0 0.0
    %128 = vmatpush1.msra.mxu0 %v44
    %129 = vmatprep.subr.mxu0 0.0
    %130 = vmatpush1.msra.mxu0 %v45
    %131 = vmatprep.subr.mxu0 0.0
    %132 = vmatpush1.msra.mxu0 %v46
    %133 = vmatprep.subr.mxu0 0.0
    %134 = vmatpush1.msra.mxu0 %v47
    %135 = vmatprep.subr.mxu0 0.0
    %136 = vmatpush1.msra.mxu0 %v48
    %137 = vmatprep.subr.mxu0 0.0
    %138 = vmatpush1.msra.mxu0 %v49
    %139 = vmatprep.subr.mxu0 0.0
    %140 = vmatpush1.msra.mxu0 %v50
    %141 = vmatprep.subr.mxu0 0.0
    %142 = vmatpush1.msra.mxu0 %v51
    %143 = vmatprep.subr.mxu0 0.0
    %144 = vmatpush1.msra.mxu0 %v52
    %145 = vmatprep.subr.mxu0 0.0
    %146 = vmatpush1.msra.mxu0 %v53
    %147 = vmatprep.subr.mxu0 0.0
    %148 = vmatpush1.msra.mxu0 %v54
    %149 = vmatprep.subr.mxu0 0.0
    %150 = vmatpush1.msra.mxu0 %v55
    %151 = vmatprep.subr.mxu0 0.0
    %152 = vmatpush1.msra.mxu0 %v56
    %153 = vmatprep.subr.mxu0 0.0
    %154 = vmatpush1.msra.mxu0 %v57
    %155 = vmatprep.subr.mxu0 0.0
    %156 = vmatpush1.msra.mxu0 %v58
    %157 = vmatprep.subr.mxu0 0.0
    %158 = vmatpush1.msra.mxu0 %v59
    %159 = vmatprep.subr.mxu0 0.0
    %160 = vmatpush1.msra.mxu0 %v60
    %161 = vmatprep.subr.mxu0 0.0
    %162 = vmatpush1.msra.mxu0 %v61
    %163 = vmatprep.subr.mxu0 0.0
    %164 = vmatpush1.msra.mxu0 %v62
    %165 = vmatprep.subr.mxu0 0.0
    %166 = vmatpush1.msra.mxu0 %v63
    %167 = vmatprep.subr.mxu0 0.0
    %168 = vmatpush1.msra.mxu0 %v64
    %169 = vmatprep.subr.mxu0 0.0
    %170 = vmatpush1.msra.mxu0 %v65
    %171 = vmatprep.subr.mxu0 0.0
    %172 = vmatpush1.msra.mxu0 %v66
    %173 = vmatprep.subr.mxu0 0.0
    %174 = vmatpush1.msra.mxu0 %v67
    %175 = vmatprep.subr.mxu0 0.0
    %176 = vmatpush1.msra.mxu0 %v68
    %177 = vmatprep.subr.mxu0 0.0
    %178 = vmatpush1.msra.mxu0 %v69
    %179 = vmatprep.subr.mxu0 0.0
    %180 = vmatpush1.msra.mxu0 %v70
    %181 = vmatprep.subr.mxu0 0.0
    %182 = vmatpush1.msra.mxu0 %v71
    %183 = vmatprep.subr.mxu0 0.0
    %184 = vmatpush1.msra.mxu0 %v72
    %185 = vmatprep.subr.mxu0 0.0
    %186 = vmatpush1.msra.mxu0 %v73
    %187 = vmatprep.mubr.f32.mxu0 %v115
    %188 = vmatmul.mubr.f32.gmra.mrb[0].mxu0 %v107
    %v189 = vpop.f32.mrb[0].mxu0
    %v190 = vadd.f32 %v97, %v189
    %v191 = vpop.f32.mrb[0].mxu0
    %192 = vdwg.mxu0
    %193 = vmatprep.subr.mxu0 0.0
    %194 = vmatpush1.msra.mxu0 %v74
    %195 = vmatprep.subr.mxu0 0.0
    %196 = vmatpush1.msra.mxu0 %v75
    %197 = vmatprep.subr.mxu0 0.0
    %198 = vmatpush1.msra.mxu0 %v76
    %199 = vmatprep.subr.mxu0 0.0
    %200 = vmatpush1.msra.mxu0 %v77
    %201 = vmatprep.subr.mxu0 0.0
    %202 = vmatpush1.msra.mxu0 %v78
    %203 = vmatprep.subr.mxu0 0.0
    %204 = vmatpush1.msra.mxu0 %v79
    %205 = vmatprep.subr.mxu0 0.0
    %206 = vmatpush1.msra.mxu0 %v80
    %207 = vmatprep.subr.mxu0 0.0
    %208 = vmatpush1.msra.mxu0 %v81
    %209 = vmatprep.subr.mxu0 0.0
    %210 = vmatpush1.msra.mxu0 %v82
    %211 = vmatprep.subr.mxu0 0.0
    %212 = vmatpush1.msra.mxu0 %v83
    %213 = vmatprep.subr.mxu0 0.0
    %214 = vmatpush1.msra.mxu0 %v84
    %215 = vmatprep.subr.mxu0 0.0
    %216 = vmatpush1.msra.mxu0 %v85
    %217 = vmatprep.subr.mxu0 0.0
    %218 = vmatpush1.msra.mxu0 %v86
    %219 = vmatprep.subr.mxu0 0.0
    %220 = vmatpush1.msra.mxu0 %v87
    %221 = vmatprep.subr.mxu0 0.0
    %222 = vmatpush1.msra.mxu0 %v88
    %223 = vmatprep.subr.mxu0 0.0
    %224 = vmatpush1.msra.mxu0 %v89
    %225 = vmatprep.subr.mxu0 0.0
    %226 = vmatpush1.msra.mxu0 %v90
    %227 = vmatprep.subr.mxu0 0.0
    %228 = vmatpush1.msra.mxu0 %v91
    %229 = vmatprep.subr.mxu0 0.0
    %230 = vmatpush1.msra.mxu0 0.0
    %231 = vmatprep.subr.mxu0 0.0
    %232 = vmatpush1.msra.mxu0 0.0
    %233 = vmatprep.subr.mxu0 0.0
    %234 = vmatpush1.msra.mxu0 0.0
    %235 = vmatprep.subr.mxu0 0.0
    %236 = vmatpush1.msra.mxu0 0.0
    %237 = vmatprep.subr.mxu0 0.0
    %238 = vmatpush1.msra.mxu0 0.0
    %239 = vmatprep.subr.mxu0 0.0
    %240 = vmatpush1.msra.mxu0 0.0
    %241 = vmatprep.subr.mxu0 0.0
    %242 = vmatpush1.msra.mxu0 0.0
    %243 = vmatprep.subr.mxu0 0.0
    %244 = vmatpush1.msra.mxu0 0.0
    %245 = vmatprep.subr.mxu0 0.0
    %246 = vmatpush1.msra.mxu0 0.0
    %247 = vmatprep.subr.mxu0 0.0
    %248 = vmatpush1.msra.mxu0 0.0
    %249 = vmatprep.subr.mxu0 0.0
    %250 = vmatpush1.msra.mxu0 0.0
    %251 = vmatprep.subr.mxu0 0.0
    %252 = vmatpush1.msra.mxu0 0.0
    %253 = vmatprep.subr.mxu0 0.0
    %254 = vmatpush1.msra.mxu0 0.0
    %255 = vmatprep.subr.mxu0 0.0
    %256 = vmatpush1.msra.mxu0 0.0
    %257 = vmatprep.mubr.f32.mxu0 %v121
    %258 = vmatmul.mubr.f32.gmra.mrb[0].mxu0 %v114
    %v259 = vpop.f32.mrb[0].mxu0
    %v260 = vadd.f32 %v190, %v259
    %v261 = vpop.f32.mrb[0].mxu0
    %262 = vdwg.mxu0
    %263 = vst [vmem:[#allocation7] sm:$0x3] %v260
    // Predicated region
    $region22: #{tpu_custom_call.1} parent=1 // pred_check
      _
    $region23: #{tpu_custom_call.1} parent=1 // pred_check_branch
      %265 = sbr.rel (0) target = $region25
    $region24: #{tpu_custom_call.1} parent=1 // pred_region
      %s267 = ssub.s32 32, 32
      %268 = vsyncadd [#allocation4], %s267
      %s270 = sshll.u32 [#allocation7], 4
      %s271 = int_to_ptr.vmem [resolvable:$true] %s270
      %273 = dma.vmem_to_hbm [thread:$0]  %s271, 32, %s3, [#allocation4]
    $region25: #{tpu_custom_call.1} parent=1 // pred_fallthru
      _
    // Predicated region
    $region26: #{tpu_custom_call.1} parent=1 // pred_check
      _
    $region27: #{tpu_custom_call.1} parent=1 // pred_check_branch
      %275 = sbr.rel (0) target = $region29
    $region28: #{tpu_custom_call.1} parent=1 // pred_region
      %276 = dma.done [#allocation4], 32
    $region29: #{tpu_custom_call.1} parent=1 // pred_fallthru
      _
    %277 = vsyncpa [#allocation3], 1
    %278 = vsyncpa [#allocation6], 1
    %279 = vsyncpa [#allocation4], 1

</llo_original>
